<compile_context>
chip_gen: v7x
topology: tpu7x:2x2x1
jax: 0.10.0
libtpu: 0.0.40
codegen_flags: <defaults>
</compile_context>

<pallas_src>
import numpy as np
import jax
import jax.numpy as jnp
from jax.experimental import pallas as pl
from jax.experimental.pallas import tpu as pltpu

_LANE = 128


def _build_a2a_kernel(segs_by_rank):
    """Fully static, per-destination-rank unrolled all-to-all copy kernel.

    segs_by_rank[r] = list of (g, cnt, dloc):
      g    : global source row in the flattened (W*N, D) input
      cnt  : number of rows in this chunk
      dloc : destination row offset inside rank r's (N, D) output block
    """
    W = len(segs_by_rank)

    def kernel(x_hbm, o_ref, seg_sem):
        pid = pl.program_id(0)
        for r in range(W):                      # static unroll over dest ranks
            segs = segs_by_rank[r]
            if not segs:
                continue

            def rank_body(segs=segs):
                # Chunk DMAs go straight HBM -> final rows of the output block
                # (no VMEM staging, no vector scatter).
                copies = [
                    pltpu.make_async_copy(
                        x_hbm.at[pl.ds(g, cnt), :],
                        o_ref.at[pl.ds(dloc, cnt), :],
                        seg_sem.at[j],
                    )
                    for j, (g, cnt, dloc) in enumerate(segs)
                ]
                # Batch-issue every chunk fetch for this rank (disjoint rows),
                # then drain: DMA engines overlap the per-chunk latency.
                for cp in copies:
                    cp.start()
                for cp in copies:
                    cp.wait()

            pl.when(pid == r)(rank_body)

    return kernel


def all_to_all_single_pallas(x_stacked, split_matrix):
    """Emulated dist.all_to_all_single over a simulated world.

    x_stacked   : (W, N, D) array; x_stacked[s] is rank s's `input1`.
    split_matrix: (W, W) ints; split_matrix[s, r] = rows rank s sends to rank r
                  (rank s's input_split_sizes = split_matrix[s],
                   rank r's output_split_sizes = split_matrix[:, r]).
    Returns Y (W, N, D): Y[r] is rank r's `output1`.
    """
    W, N, D = x_stacked.shape
    S = np.asarray(split_matrix, dtype=np.int64)
    assert S.shape == (W, W) and np.all(S >= 0)
    assert np.all(S.sum(axis=1) == N) and np.all(S.sum(axis=0) == N), (
        "split matrix must keep per-rank input/output row counts equal to N")

    itemsize = np.dtype(x_stacked.dtype).itemsize
    sublane = (8 * 4) // itemsize        # packed tile: 8 f32 / 16 bf16 / 32 int8
    assert N % sublane == 0, f"rows per rank must be a multiple of {sublane}"
    assert D % _LANE == 0, "feature dim must be a multiple of 128"

    # Exclusive-cumsum row offsets (trace-time constants).
    in_off = np.concatenate(
        [np.zeros((W, 1), np.int64), np.cumsum(S, axis=1)[:, :-1]], axis=1)  # [s, r]
    out_off = np.concatenate(
        [np.zeros((1, W), np.int64), np.cumsum(S, axis=0)[:-1, :]], axis=0)  # [s, r]

    # Static copy schedule: per destination rank, the chunks it receives.
    segs_by_rank = []
    max_segs = 1
    for r in range(W):
        segs = []
        for s in range(W):
            cnt = int(S[s, r])
            if cnt == 0:
                continue
            g = s * N + int(in_off[s, r])        # global src row of the chunk
            segs.append((g, cnt, int(out_off[s, r])))
        max_segs = max(max_segs, len(segs))
        segs_by_rank.append(segs)

    x_flat = x_stacked.reshape(W * N, D)
    kernel = _build_a2a_kernel(segs_by_rank)

    # VMEM: the pipeline double-buffers the (N, D) output block; chunk DMAs
    # need no staging.  Budget that plus headroom, capped to v7x's 64 MiB/TC.
    vmem_limit = int(min(64 << 20, 4 * N * D * itemsize + (8 << 20)))

    y_flat = pl.pallas_call(
        kernel,
        out_shape=jax.ShapeDtypeStruct((W * N, D), x_stacked.dtype),
        grid=(W,),
        in_specs=[pl.BlockSpec(memory_space=pl.ANY)],     # X stays in HBM; DMA on demand
        out_specs=pl.BlockSpec((N, D), lambda r: (r, 0)),  # lane-dense per-rank block
        scratch_shapes=[pltpu.SemaphoreType.DMA((max_segs,))],
        compiler_params=pltpu.CompilerParams(
            dimension_semantics=("parallel",),             # v7x: shard ranks over both TCs
            vmem_limit_bytes=vmem_limit),
        cost_estimate=pl.CostEstimate(
            flops=0, transcendentals=0,
            bytes_accessed=int(2 * W * N * D * itemsize)),
    )(x_flat)
    return y_flat.reshape(W, N, D)


def _reference_all_to_all(x, S):
    W, N, D = x.shape
    y = np.zeros_like(x)
    for r in range(W):
        ooff = 0
        for s in range(W):
            cnt = int(S[s, r])
            ioff = int(np.sum(S[s, :r]))
            y[r, ooff:ooff + cnt] = x[s, ioff:ioff + cnt]
            ooff += cnt
    return y


if __name__ == "__main__":
    W, N, D = 4, 8, 128  # world size, rows per rank, feature dim

    # Non-uniform split sizes; rows (input splits) and cols (output splits)
    # each sum to N so every simulated rank keeps a static (N, D) shape.
    split_matrix = np.array([[1, 2, 3, 2],
                             [3, 1, 2, 2],
                             [2, 3, 1, 2],
                             [2, 2, 2, 2]], dtype=np.int32)

    key = jax.random.PRNGKey(0)
    x = jax.random.normal(key, (W, N, D), dtype=jnp.float32)

    y = all_to_all_single_pallas(x, split_matrix)
    y = jax.block_until_ready(y)

    y_ref = _reference_all_to_all(np.asarray(x), split_matrix)
    np.testing.assert_allclose(np.asarray(y), y_ref, rtol=0, atol=0)

    print("KERNEL_OK")
</pallas_src>

<mosaic_0001>
module attributes {stable_mosaic.version = 11 : i64} {
  func.func @kernel(%arg0: i32, %arg1: memref<32x128xf32, #tpu.memory_space<any>>, %arg2: memref<8x128xf32, #tpu.memory_space<vmem>>, %arg3: memref<4x!tpu.dma_semaphore, #tpu.memory_space<semaphore_mem>>) attributes {dimension_semantics = [#tpu.dimension_semantics<parallel>], iteration_bounds = array<i64: 4>, scalar_prefetch = 0 : i64, scratch_operands = 1 : i64, tpu.core_type = #tpu.core_type<tc>, window_params = [{}, {transform_indices = @transform_1, window_bounds = array<i64: 8, 128>}]} {
    %c0_i32 = arith.constant 0 : i32
    %0 = arith.cmpi eq, %arg0, %c0_i32 : i32
    %1 = arith.extui %0 : i1 to i32
    %c0_i32_0 = arith.constant 0 : i32
    %2 = arith.cmpi ne, %1, %c0_i32_0 : i32
    scf.if %2 {
      %c0_i32_4 = arith.constant 0 : i32
      %c0_i32_5 = arith.constant 0 : i32
      %c0_i32_6 = arith.constant 0 : i32
      %12 = tpu.memref_slice %arg1[%c0_i32_5, %c0_i32_6] : memref<32x128xf32, #tpu.memory_space<any>> -> memref<1x128xf32, #tpu.memory_space<any>>
      %c0_i32_7 = arith.constant 0 : i32
      %c0_i32_8 = arith.constant 0 : i32
      %13 = tpu.memref_slice %arg2[%c0_i32_7, %c0_i32_8] : memref<8x128xf32, #tpu.memory_space<vmem>> -> memref<1x128xf32, #tpu.memory_space<vmem>>
      %14 = tpu.memref_slice %arg3[%c0_i32_4] : memref<4x!tpu.dma_semaphore, #tpu.memory_space<semaphore_mem>> -> memref<1x!tpu.dma_semaphore, #tpu.memory_space<semaphore_mem>>
      %15 = tpu.memref_squeeze %14 : memref<1x!tpu.dma_semaphore, #tpu.memory_space<semaphore_mem>> -> memref<!tpu.dma_semaphore, #tpu.memory_space<semaphore_mem>>
      tpu.enqueue_dma source(%12 : memref<1x128xf32, #tpu.memory_space<any>>) target(%13 : memref<1x128xf32, #tpu.memory_space<vmem>>) target_semaphore(%15 : memref<!tpu.dma_semaphore, #tpu.memory_space<semaphore_mem>>)
      %c1_i32_9 = arith.constant 1 : i32
      %c8_i32 = arith.constant 8 : i32
      %c0_i32_10 = arith.constant 0 : i32
      %16 = tpu.memref_slice %arg1[%c8_i32, %c0_i32_10] : memref<32x128xf32, #tpu.memory_space<any>> -> memref<3x128xf32, #tpu.memory_space<any>>
      %c1_i32_11 = arith.constant 1 : i32
      %c0_i32_12 = arith.constant 0 : i32
      %17 = tpu.memref_slice %arg2[%c1_i32_11, %c0_i32_12] : memref<8x128xf32, #tpu.memory_space<vmem>> -> memref<3x128xf32, #tpu.memory_space<vmem>>
      %18 = tpu.memref_slice %arg3[%c1_i32_9] : memref<4x!tpu.dma_semaphore, #tpu.memory_space<semaphore_mem>> -> memref<1x!tpu.dma_semaphore, #tpu.memory_space<semaphore_mem>>
      %19 = tpu.memref_squeeze %18 : memref<1x!tpu.dma_semaphore, #tpu.memory_space<semaphore_mem>> -> memref<!tpu.dma_semaphore, #tpu.memory_space<semaphore_mem>>
      tpu.enqueue_dma source(%16 : memref<3x128xf32, #tpu.memory_space<any>>) target(%17 : memref<3x128xf32, #tpu.memory_space<vmem>>) target_semaphore(%19 : memref<!tpu.dma_semaphore, #tpu.memory_space<semaphore_mem>>)
      %c2_i32_13 = arith.constant 2 : i32
      %c16_i32 = arith.constant 16 : i32
      %c0_i32_14 = arith.constant 0 : i32
      %20 = tpu.memref_slice %arg1[%c16_i32, %c0_i32_14] : memref<32x128xf32, #tpu.memory_space<any>> -> memref<2x128xf32, #tpu.memory_space<any>>
      %c4_i32 = arith.constant 4 : i32
      %c0_i32_15 = arith.constant 0 : i32
      %21 = tpu.memref_slice %arg2[%c4_i32, %c0_i32_15] : memref<8x128xf32, #tpu.memory_space<vmem>> -> memref<2x128xf32, #tpu.memory_space<vmem>>
      %22 = tpu.memref_slice %arg3[%c2_i32_13] : memref<4x!tpu.dma_semaphore, #tpu.memory_space<semaphore_mem>> -> memref<1x!tpu.dma_semaphore, #tpu.memory_space<semaphore_mem>>
      %23 = tpu.memref_squeeze %22 : memref<1x!tpu.dma_semaphore, #tpu.memory_space<semaphore_mem>> -> memref<!tpu.dma_semaphore, #tpu.memory_space<semaphore_mem>>
      tpu.enqueue_dma source(%20 : memref<2x128xf32, #tpu.memory_space<any>>) target(%21 : memref<2x128xf32, #tpu.memory_space<vmem>>) target_semaphore(%23 : memref<!tpu.dma_semaphore, #tpu.memory_space<semaphore_mem>>)
      %c3_i32_16 = arith.constant 3 : i32
      %c24_i32 = arith.constant 24 : i32
      %c0_i32_17 = arith.constant 0 : i32
      %24 = tpu.memref_slice %arg1[%c24_i32, %c0_i32_17] : memref<32x128xf32, #tpu.memory_space<any>> -> memref<2x128xf32, #tpu.memory_space<any>>
      %c6_i32 = arith.constant 6 : i32
      %c0_i32_18 = arith.constant 0 : i32
      %25 = tpu.memref_slice %arg2[%c6_i32, %c0_i32_18] : memref<8x128xf32, #tpu.memory_space<vmem>> -> memref<2x128xf32, #tpu.memory_space<vmem>>
      %26 = tpu.memref_slice %arg3[%c3_i32_16] : memref<4x!tpu.dma_semaphore, #tpu.memory_space<semaphore_mem>> -> memref<1x!tpu.dma_semaphore, #tpu.memory_space<semaphore_mem>>
      %27 = tpu.memref_squeeze %26 : memref<1x!tpu.dma_semaphore, #tpu.memory_space<semaphore_mem>> -> memref<!tpu.dma_semaphore, #tpu.memory_space<semaphore_mem>>
      tpu.enqueue_dma source(%24 : memref<2x128xf32, #tpu.memory_space<any>>) target(%25 : memref<2x128xf32, #tpu.memory_space<vmem>>) target_semaphore(%27 : memref<!tpu.dma_semaphore, #tpu.memory_space<semaphore_mem>>)
      %c0_i32_19 = arith.constant 0 : i32
      %c0_i32_20 = arith.constant 0 : i32
      %c0_i32_21 = arith.constant 0 : i32
      %28 = tpu.memref_slice %arg1[%c0_i32_20, %c0_i32_21] : memref<32x128xf32, #tpu.memory_space<any>> -> memref<1x128xf32, #tpu.memory_space<any>>
      %c0_i32_22 = arith.constant 0 : i32
      %c0_i32_23 = arith.constant 0 : i32
      %29 = tpu.memref_slice %arg2[%c0_i32_22, %c0_i32_23] : memref<8x128xf32, #tpu.memory_space<vmem>> -> memref<1x128xf32, #tpu.memory_space<vmem>>
      %30 = tpu.memref_slice %arg3[%c0_i32_19] : memref<4x!tpu.dma_semaphore, #tpu.memory_space<semaphore_mem>> -> memref<1x!tpu.dma_semaphore, #tpu.memory_space<semaphore_mem>>
      %31 = tpu.memref_squeeze %30 : memref<1x!tpu.dma_semaphore, #tpu.memory_space<semaphore_mem>> -> memref<!tpu.dma_semaphore, #tpu.memory_space<semaphore_mem>>
      tpu.wait_dma2 semaphore(%31 : memref<!tpu.dma_semaphore, #tpu.memory_space<semaphore_mem>>) src(%28 : memref<1x128xf32, #tpu.memory_space<any>>) dst(%29 : memref<1x128xf32, #tpu.memory_space<vmem>>)
      %c1_i32_24 = arith.constant 1 : i32
      %c8_i32_25 = arith.constant 8 : i32
      %c0_i32_26 = arith.constant 0 : i32
      %32 = tpu.memref_slice %arg1[%c8_i32_25, %c0_i32_26] : memref<32x128xf32, #tpu.memory_space<any>> -> memref<3x128xf32, #tpu.memory_space<any>>
      %c1_i32_27 = arith.constant 1 : i32
      %c0_i32_28 = arith.constant 0 : i32
      %33 = tpu.memref_slice %arg2[%c1_i32_27, %c0_i32_28] : memref<8x128xf32, #tpu.memory_space<vmem>> -> memref<3x128xf32, #tpu.memory_space<vmem>>
      %34 = tpu.memref_slice %arg3[%c1_i32_24] : memref<4x!tpu.dma_semaphore, #tpu.memory_space<semaphore_mem>> -> memref<1x!tpu.dma_semaphore, #tpu.memory_space<semaphore_mem>>
      %35 = tpu.memref_squeeze %34 : memref<1x!tpu.dma_semaphore, #tpu.memory_space<semaphore_mem>> -> memref<!tpu.dma_semaphore, #tpu.memory_space<semaphore_mem>>
      tpu.wait_dma2 semaphore(%35 : memref<!tpu.dma_semaphore, #tpu.memory_space<semaphore_mem>>) src(%32 : memref<3x128xf32, #tpu.memory_space<any>>) dst(%33 : memref<3x128xf32, #tpu.memory_space<vmem>>)
      %c2_i32_29 = arith.constant 2 : i32
      %c16_i32_30 = arith.constant 16 : i32
      %c0_i32_31 = arith.constant 0 : i32
      %36 = tpu.memref_slice %arg1[%c16_i32_30, %c0_i32_31] : memref<32x128xf32, #tpu.memory_space<any>> -> memref<2x128xf32, #tpu.memory_space<any>>
      %c4_i32_32 = arith.constant 4 : i32
      %c0_i32_33 = arith.constant 0 : i32
      %37 = tpu.memref_slice %arg2[%c4_i32_32, %c0_i32_33] : memref<8x128xf32, #tpu.memory_space<vmem>> -> memref<2x128xf32, #tpu.memory_space<vmem>>
      %38 = tpu.memref_slice %arg3[%c2_i32_29] : memref<4x!tpu.dma_semaphore, #tpu.memory_space<semaphore_mem>> -> memref<1x!tpu.dma_semaphore, #tpu.memory_space<semaphore_mem>>
      %39 = tpu.memref_squeeze %38 : memref<1x!tpu.dma_semaphore, #tpu.memory_space<semaphore_mem>> -> memref<!tpu.dma_semaphore, #tpu.memory_space<semaphore_mem>>
      tpu.wait_dma2 semaphore(%39 : memref<!tpu.dma_semaphore, #tpu.memory_space<semaphore_mem>>) src(%36 : memref<2x128xf32, #tpu.memory_space<any>>) dst(%37 : memref<2x128xf32, #tpu.memory_space<vmem>>)
      %c3_i32_34 = arith.constant 3 : i32
      %c24_i32_35 = arith.constant 24 : i32
      %c0_i32_36 = arith.constant 0 : i32
      %40 = tpu.memref_slice %arg1[%c24_i32_35, %c0_i32_36] : memref<32x128xf32, #tpu.memory_space<any>> -> memref<2x128xf32, #tpu.memory_space<any>>
      %c6_i32_37 = arith.constant 6 : i32
      %c0_i32_38 = arith.constant 0 : i32
      %41 = tpu.memref_slice %arg2[%c6_i32_37, %c0_i32_38] : memref<8x128xf32, #tpu.memory_space<vmem>> -> memref<2x128xf32, #tpu.memory_space<vmem>>
      %42 = tpu.memref_slice %arg3[%c3_i32_34] : memref<4x!tpu.dma_semaphore, #tpu.memory_space<semaphore_mem>> -> memref<1x!tpu.dma_semaphore, #tpu.memory_space<semaphore_mem>>
      %43 = tpu.memref_squeeze %42 : memref<1x!tpu.dma_semaphore, #tpu.memory_space<semaphore_mem>> -> memref<!tpu.dma_semaphore, #tpu.memory_space<semaphore_mem>>
      tpu.wait_dma2 semaphore(%43 : memref<!tpu.dma_semaphore, #tpu.memory_space<semaphore_mem>>) src(%40 : memref<2x128xf32, #tpu.memory_space<any>>) dst(%41 : memref<2x128xf32, #tpu.memory_space<vmem>>)
    } else {
    }
    %c1_i32 = arith.constant 1 : i32
    %3 = arith.cmpi eq, %arg0, %c1_i32 : i32
    %4 = arith.extui %3 : i1 to i32
    %c0_i32_1 = arith.constant 0 : i32
    %5 = arith.cmpi ne, %4, %c0_i32_1 : i32
    scf.if %5 {
      %c0_i32_4 = arith.constant 0 : i32
      %c1_i32_5 = arith.constant 1 : i32
      %c0_i32_6 = arith.constant 0 : i32
      %12 = tpu.memref_slice %arg1[%c1_i32_5, %c0_i32_6] : memref<32x128xf32, #tpu.memory_space<any>> -> memref<2x128xf32, #tpu.memory_space<any>>
      %c0_i32_7 = arith.constant 0 : i32
      %c0_i32_8 = arith.constant 0 : i32
      %13 = tpu.memref_slice %arg2[%c0_i32_7, %c0_i32_8] : memref<8x128xf32, #tpu.memory_space<vmem>> -> memref<2x128xf32, #tpu.memory_space<vmem>>
      %14 = tpu.memref_slice %arg3[%c0_i32_4] : memref<4x!tpu.dma_semaphore, #tpu.memory_space<semaphore_mem>> -> memref<1x!tpu.dma_semaphore, #tpu.memory_space<semaphore_mem>>
      %15 = tpu.memref_squeeze %14 : memref<1x!tpu.dma_semaphore, #tpu.memory_space<semaphore_mem>> -> memref<!tpu.dma_semaphore, #tpu.memory_space<semaphore_mem>>
      tpu.enqueue_dma source(%12 : memref<2x128xf32, #tpu.memory_space<any>>) target(%13 : memref<2x128xf32, #tpu.memory_space<vmem>>) target_semaphore(%15 : memref<!tpu.dma_semaphore, #tpu.memory_space<semaphore_mem>>)
      %c1_i32_9 = arith.constant 1 : i32
      %c11_i32 = arith.constant 11 : i32
      %c0_i32_10 = arith.constant 0 : i32
      %16 = tpu.memref_slice %arg1[%c11_i32, %c0_i32_10] : memref<32x128xf32, #tpu.memory_space<any>> -> memref<1x128xf32, #tpu.memory_space<any>>
      %c2_i32_11 = arith.constant 2 : i32
      %c0_i32_12 = arith.constant 0 : i32
      %17 = tpu.memref_slice %arg2[%c2_i32_11, %c0_i32_12] : memref<8x128xf32, #tpu.memory_space<vmem>> -> memref<1x128xf32, #tpu.memory_space<vmem>>
      %18 = tpu.memref_slice %arg3[%c1_i32_9] : memref<4x!tpu.dma_semaphore, #tpu.memory_space<semaphore_mem>> -> memref<1x!tpu.dma_semaphore, #tpu.memory_space<semaphore_mem>>
      %19 = tpu.memref_squeeze %18 : memref<1x!tpu.dma_semaphore, #tpu.memory_space<semaphore_mem>> -> memref<!tpu.dma_semaphore, #tpu.memory_space<semaphore_mem>>
      tpu.enqueue_dma source(%16 : memref<1x128xf32, #tpu.memory_space<any>>) target(%17 : memref<1x128xf32, #tpu.memory_space<vmem>>) target_semaphore(%19 : memref<!tpu.dma_semaphore, #tpu.memory_space<semaphore_mem>>)
      %c2_i32_13 = arith.constant 2 : i32
      %c18_i32 = arith.constant 18 : i32
      %c0_i32_14 = arith.constant 0 : i32
      %20 = tpu.memref_slice %arg1[%c18_i32, %c0_i32_14] : memref<32x128xf32, #tpu.memory_space<any>> -> memref<3x128xf32, #tpu.memory_space<any>>
      %c3_i32_15 = arith.constant 3 : i32
      %c0_i32_16 = arith.constant 0 : i32
      %21 = tpu.memref_slice %arg2[%c3_i32_15, %c0_i32_16] : memref<8x128xf32, #tpu.memory_space<vmem>> -> memref<3x128xf32, #tpu.memory_space<vmem>>
      %22 = tpu.memref_slice %arg3[%c2_i32_13] : memref<4x!tpu.dma_semaphore, #tpu.memory_space<semaphore_mem>> -> memref<1x!tpu.dma_semaphore, #tpu.memory_space<semaphore_mem>>
      %23 = tpu.memref_squeeze %22 : memref<1x!tpu.dma_semaphore, #tpu.memory_space<semaphore_mem>> -> memref<!tpu.dma_semaphore, #tpu.memory_space<semaphore_mem>>
      tpu.enqueue_dma source(%20 : memref<3x128xf32, #tpu.memory_space<any>>) target(%21 : memref<3x128xf32, #tpu.memory_space<vmem>>) target_semaphore(%23 : memref<!tpu.dma_semaphore, #tpu.memory_space<semaphore_mem>>)
      %c3_i32_17 = arith.constant 3 : i32
      %c26_i32 = arith.constant 26 : i32
      %c0_i32_18 = arith.constant 0 : i32
      %24 = tpu.memref_slice %arg1[%c26_i32, %c0_i32_18] : memref<32x128xf32, #tpu.memory_space<any>> -> memref<2x128xf32, #tpu.memory_space<any>>
      %c6_i32 = arith.constant 6 : i32
      %c0_i32_19 = arith.constant 0 : i32
      %25 = tpu.memref_slice %arg2[%c6_i32, %c0_i32_19] : memref<8x128xf32, #tpu.memory_space<vmem>> -> memref<2x128xf32, #tpu.memory_space<vmem>>
      %26 = tpu.memref_slice %arg3[%c3_i32_17] : memref<4x!tpu.dma_semaphore, #tpu.memory_space<semaphore_mem>> -> memref<1x!tpu.dma_semaphore, #tpu.memory_space<semaphore_mem>>
      %27 = tpu.memref_squeeze %26 : memref<1x!tpu.dma_semaphore, #tpu.memory_space<semaphore_mem>> -> memref<!tpu.dma_semaphore, #tpu.memory_space<semaphore_mem>>
      tpu.enqueue_dma source(%24 : memref<2x128xf32, #tpu.memory_space<any>>) target(%25 : memref<2x128xf32, #tpu.memory_space<vmem>>) target_semaphore(%27 : memref<!tpu.dma_semaphore, #tpu.memory_space<semaphore_mem>>)
      %c0_i32_20 = arith.constant 0 : i32
      %c1_i32_21 = arith.constant 1 : i32
      %c0_i32_22 = arith.constant 0 : i32
      %28 = tpu.memref_slice %arg1[%c1_i32_21, %c0_i32_22] : memref<32x128xf32, #tpu.memory_space<any>> -> memref<2x128xf32, #tpu.memory_space<any>>
      %c0_i32_23 = arith.constant 0 : i32
      %c0_i32_24 = arith.constant 0 : i32
      %29 = tpu.memref_slice %arg2[%c0_i32_23, %c0_i32_24] : memref<8x128xf32, #tpu.memory_space<vmem>> -> memref<2x128xf32, #tpu.memory_space<vmem>>
      %30 = tpu.memref_slice %arg3[%c0_i32_20] : memref<4x!tpu.dma_semaphore, #tpu.memory_space<semaphore_mem>> -> memref<1x!tpu.dma_semaphore, #tpu.memory_space<semaphore_mem>>
      %31 = tpu.memref_squeeze %30 : memref<1x!tpu.dma_semaphore, #tpu.memory_space<semaphore_mem>> -> memref<!tpu.dma_semaphore, #tpu.memory_space<semaphore_mem>>
      tpu.wait_dma2 semaphore(%31 : memref<!tpu.dma_semaphore, #tpu.memory_space<semaphore_mem>>) src(%28 : memref<2x128xf32, #tpu.memory_space<any>>) dst(%29 : memref<2x128xf32, #tpu.memory_space<vmem>>)
      %c1_i32_25 = arith.constant 1 : i32
      %c11_i32_26 = arith.constant 11 : i32
      %c0_i32_27 = arith.constant 0 : i32
      %32 = tpu.memref_slice %arg1[%c11_i32_26, %c0_i32_27] : memref<32x128xf32, #tpu.memory_space<any>> -> memref<1x128xf32, #tpu.memory_space<any>>
      %c2_i32_28 = arith.constant 2 : i32
      %c0_i32_29 = arith.constant 0 : i32
      %33 = tpu.memref_slice %arg2[%c2_i32_28, %c0_i32_29] : memref<8x128xf32, #tpu.memory_space<vmem>> -> memref<1x128xf32, #tpu.memory_space<vmem>>
      %34 = tpu.memref_slice %arg3[%c1_i32_25] : memref<4x!tpu.dma_semaphore, #tpu.memory_space<semaphore_mem>> -> memref<1x!tpu.dma_semaphore, #tpu.memory_space<semaphore_mem>>
      %35 = tpu.memref_squeeze %34 : memref<1x!tpu.dma_semaphore, #tpu.memory_space<semaphore_mem>> -> memref<!tpu.dma_semaphore, #tpu.memory_space<semaphore_mem>>
      tpu.wait_dma2 semaphore(%35 : memref<!tpu.dma_semaphore, #tpu.memory_space<semaphore_mem>>) src(%32 : memref<1x128xf32, #tpu.memory_space<any>>) dst(%33 : memref<1x128xf32, #tpu.memory_space<vmem>>)
      %c2_i32_30 = arith.constant 2 : i32
      %c18_i32_31 = arith.constant 18 : i32
      %c0_i32_32 = arith.constant 0 : i32
      %36 = tpu.memref_slice %arg1[%c18_i32_31, %c0_i32_32] : memref<32x128xf32, #tpu.memory_space<any>> -> memref<3x128xf32, #tpu.memory_space<any>>
      %c3_i32_33 = arith.constant 3 : i32
      %c0_i32_34 = arith.constant 0 : i32
      %37 = tpu.memref_slice %arg2[%c3_i32_33, %c0_i32_34] : memref<8x128xf32, #tpu.memory_space<vmem>> -> memref<3x128xf32, #tpu.memory_space<vmem>>
      %38 = tpu.memref_slice %arg3[%c2_i32_30] : memref<4x!tpu.dma_semaphore, #tpu.memory_space<semaphore_mem>> -> memref<1x!tpu.dma_semaphore, #tpu.memory_space<semaphore_mem>>
      %39 = tpu.memref_squeeze %38 : memref<1x!tpu.dma_semaphore, #tpu.memory_space<semaphore_mem>> -> memref<!tpu.dma_semaphore, #tpu.memory_space<semaphore_mem>>
      tpu.wait_dma2 semaphore(%39 : memref<!tpu.dma_semaphore, #tpu.memory_space<semaphore_mem>>) src(%36 : memref<3x128xf32, #tpu.memory_space<any>>) dst(%37 : memref<3x128xf32, #tpu.memory_space<vmem>>)
      %c3_i32_35 = arith.constant 3 : i32
      %c26_i32_36 = arith.constant 26 : i32
      %c0_i32_37 = arith.constant 0 : i32
      %40 = tpu.memref_slice %arg1[%c26_i32_36, %c0_i32_37] : memref<32x128xf32, #tpu.memory_space<any>> -> memref<2x128xf32, #tpu.memory_space<any>>
      %c6_i32_38 = arith.constant 6 : i32
      %c0_i32_39 = arith.constant 0 : i32
      %41 = tpu.memref_slice %arg2[%c6_i32_38, %c0_i32_39] : memref<8x128xf32, #tpu.memory_space<vmem>> -> memref<2x128xf32, #tpu.memory_space<vmem>>
      %42 = tpu.memref_slice %arg3[%c3_i32_35] : memref<4x!tpu.dma_semaphore, #tpu.memory_space<semaphore_mem>> -> memref<1x!tpu.dma_semaphore, #tpu.memory_space<semaphore_mem>>
      %43 = tpu.memref_squeeze %42 : memref<1x!tpu.dma_semaphore, #tpu.memory_space<semaphore_mem>> -> memref<!tpu.dma_semaphore, #tpu.memory_space<semaphore_mem>>
      tpu.wait_dma2 semaphore(%43 : memref<!tpu.dma_semaphore, #tpu.memory_space<semaphore_mem>>) src(%40 : memref<2x128xf32, #tpu.memory_space<any>>) dst(%41 : memref<2x128xf32, #tpu.memory_space<vmem>>)
    } else {
    }
    %c2_i32 = arith.constant 2 : i32
    %6 = arith.cmpi eq, %arg0, %c2_i32 : i32
    %7 = arith.extui %6 : i1 to i32
    %c0_i32_2 = arith.constant 0 : i32
    %8 = arith.cmpi ne, %7, %c0_i32_2 : i32
    scf.if %8 {
      %c0_i32_4 = arith.constant 0 : i32
      %c3_i32_5 = arith.constant 3 : i32
      %c0_i32_6 = arith.constant 0 : i32
      %12 = tpu.memref_slice %arg1[%c3_i32_5, %c0_i32_6] : memref<32x128xf32, #tpu.memory_space<any>> -> memref<3x128xf32, #tpu.memory_space<any>>
      %c0_i32_7 = arith.constant 0 : i32
      %c0_i32_8 = arith.constant 0 : i32
      %13 = tpu.memref_slice %arg2[%c0_i32_7, %c0_i32_8] : memref<8x128xf32, #tpu.memory_space<vmem>> -> memref<3x128xf32, #tpu.memory_space<vmem>>
      %14 = tpu.memref_slice %arg3[%c0_i32_4] : memref<4x!tpu.dma_semaphore, #tpu.memory_space<semaphore_mem>> -> memref<1x!tpu.dma_semaphore, #tpu.memory_space<semaphore_mem>>
      %15 = tpu.memref_squeeze %14 : memref<1x!tpu.dma_semaphore, #tpu.memory_space<semaphore_mem>> -> memref<!tpu.dma_semaphore, #tpu.memory_space<semaphore_mem>>
      tpu.enqueue_dma source(%12 : memref<3x128xf32, #tpu.memory_space<any>>) target(%13 : memref<3x128xf32, #tpu.memory_space<vmem>>) target_semaphore(%15 : memref<!tpu.dma_semaphore, #tpu.memory_space<semaphore_mem>>)
      %c1_i32_9 = arith.constant 1 : i32
      %c12_i32 = arith.constant 12 : i32
      %c0_i32_10 = arith.constant 0 : i32
      %16 = tpu.memref_slice %arg1[%c12_i32, %c0_i32_10] : memref<32x128xf32, #tpu.memory_space<any>> -> memref<2x128xf32, #tpu.memory_space<any>>
      %c3_i32_11 = arith.constant 3 : i32
      %c0_i32_12 = arith.constant 0 : i32
      %17 = tpu.memref_slice %arg2[%c3_i32_11, %c0_i32_12] : memref<8x128xf32, #tpu.memory_space<vmem>> -> memref<2x128xf32, #tpu.memory_space<vmem>>
      %18 = tpu.memref_slice %arg3[%c1_i32_9] : memref<4x!tpu.dma_semaphore, #tpu.memory_space<semaphore_mem>> -> memref<1x!tpu.dma_semaphore, #tpu.memory_space<semaphore_mem>>
      %19 = tpu.memref_squeeze %18 : memref<1x!tpu.dma_semaphore, #tpu.memory_space<semaphore_mem>> -> memref<!tpu.dma_semaphore, #tpu.memory_space<semaphore_mem>>
      tpu.enqueue_dma source(%16 : memref<2x128xf32, #tpu.memory_space<any>>) target(%17 : memref<2x128xf32, #tpu.memory_space<vmem>>) target_semaphore(%19 : memref<!tpu.dma_semaphore, #tpu.memory_space<semaphore_mem>>)
      %c2_i32_13 = arith.constant 2 : i32
      %c21_i32 = arith.constant 21 : i32
      %c0_i32_14 = arith.constant 0 : i32
      %20 = tpu.memref_slice %arg1[%c21_i32, %c0_i32_14] : memref<32x128xf32, #tpu.memory_space<any>> -> memref<1x128xf32, #tpu.memory_space<any>>
      %c5_i32 = arith.constant 5 : i32
      %c0_i32_15 = arith.constant 0 : i32
      %21 = tpu.memref_slice %arg2[%c5_i32, %c0_i32_15] : memref<8x128xf32, #tpu.memory_space<vmem>> -> memref<1x128xf32, #tpu.memory_space<vmem>>
      %22 = tpu.memref_slice %arg3[%c2_i32_13] : memref<4x!tpu.dma_semaphore, #tpu.memory_space<semaphore_mem>> -> memref<1x!tpu.dma_semaphore, #tpu.memory_space<semaphore_mem>>
      %23 = tpu.memref_squeeze %22 : memref<1x!tpu.dma_semaphore, #tpu.memory_space<semaphore_mem>> -> memref<!tpu.dma_semaphore, #tpu.memory_space<semaphore_mem>>
      tpu.enqueue_dma source(%20 : memref<1x128xf32, #tpu.memory_space<any>>) target(%21 : memref<1x128xf32, #tpu.memory_space<vmem>>) target_semaphore(%23 : memref<!tpu.dma_semaphore, #tpu.memory_space<semaphore_mem>>)
      %c3_i32_16 = arith.constant 3 : i32
      %c28_i32 = arith.constant 28 : i32
      %c0_i32_17 = arith.constant 0 : i32
      %24 = tpu.memref_slice %arg1[%c28_i32, %c0_i32_17] : memref<32x128xf32, #tpu.memory_space<any>> -> memref<2x128xf32, #tpu.memory_space<any>>
      %c6_i32 = arith.constant 6 : i32
      %c0_i32_18 = arith.constant 0 : i32
      %25 = tpu.memref_slice %arg2[%c6_i32, %c0_i32_18] : memref<8x128xf32, #tpu.memory_space<vmem>> -> memref<2x128xf32, #tpu.memory_space<vmem>>
      %26 = tpu.memref_slice %arg3[%c3_i32_16] : memref<4x!tpu.dma_semaphore, #tpu.memory_space<semaphore_mem>> -> memref<1x!tpu.dma_semaphore, #tpu.memory_space<semaphore_mem>>
      %27 = tpu.memref_squeeze %26 : memref<1x!tpu.dma_semaphore, #tpu.memory_space<semaphore_mem>> -> memref<!tpu.dma_semaphore, #tpu.memory_space<semaphore_mem>>
      tpu.enqueue_dma source(%24 : memref<2x128xf32, #tpu.memory_space<any>>) target(%25 : memref<2x128xf32, #tpu.memory_space<vmem>>) target_semaphore(%27 : memref<!tpu.dma_semaphore, #tpu.memory_space<semaphore_mem>>)
      %c0_i32_19 = arith.constant 0 : i32
      %c3_i32_20 = arith.constant 3 : i32
      %c0_i32_21 = arith.constant 0 : i32
      %28 = tpu.memref_slice %arg1[%c3_i32_20, %c0_i32_21] : memref<32x128xf32, #tpu.memory_space<any>> -> memref<3x128xf32, #tpu.memory_space<any>>
      %c0_i32_22 = arith.constant 0 : i32
      %c0_i32_23 = arith.constant 0 : i32
      %29 = tpu.memref_slice %arg2[%c0_i32_22, %c0_i32_23] : memref<8x128xf32, #tpu.memory_space<vmem>> -> memref<3x128xf32, #tpu.memory_space<vmem>>
      %30 = tpu.memref_slice %arg3[%c0_i32_19] : memref<4x!tpu.dma_semaphore, #tpu.memory_space<semaphore_mem>> -> memref<1x!tpu.dma_semaphore, #tpu.memory_space<semaphore_mem>>
      %31 = tpu.memref_squeeze %30 : memref<1x!tpu.dma_semaphore, #tpu.memory_space<semaphore_mem>> -> memref<!tpu.dma_semaphore, #tpu.memory_space<semaphore_mem>>
      tpu.wait_dma2 semaphore(%31 : memref<!tpu.dma_semaphore, #tpu.memory_space<semaphore_mem>>) src(%28 : memref<3x128xf32, #tpu.memory_space<any>>) dst(%29 : memref<3x128xf32, #tpu.memory_space<vmem>>)
      %c1_i32_24 = arith.constant 1 : i32
      %c12_i32_25 = arith.constant 12 : i32
      %c0_i32_26 = arith.constant 0 : i32
      %32 = tpu.memref_slice %arg1[%c12_i32_25, %c0_i32_26] : memref<32x128xf32, #tpu.memory_space<any>> -> memref<2x128xf32, #tpu.memory_space<any>>
      %c3_i32_27 = arith.constant 3 : i32
      %c0_i32_28 = arith.constant 0 : i32
      %33 = tpu.memref_slice %arg2[%c3_i32_27, %c0_i32_28] : memref<8x128xf32, #tpu.memory_space<vmem>> -> memref<2x128xf32, #tpu.memory_space<vmem>>
      %34 = tpu.memref_slice %arg3[%c1_i32_24] : memref<4x!tpu.dma_semaphore, #tpu.memory_space<semaphore_mem>> -> memref<1x!tpu.dma_semaphore, #tpu.memory_space<semaphore_mem>>
      %35 = tpu.memref_squeeze %34 : memref<1x!tpu.dma_semaphore, #tpu.memory_space<semaphore_mem>> -> memref<!tpu.dma_semaphore, #tpu.memory_space<semaphore_mem>>
      tpu.wait_dma2 semaphore(%35 : memref<!tpu.dma_semaphore, #tpu.memory_space<semaphore_mem>>) src(%32 : memref<2x128xf32, #tpu.memory_space<any>>) dst(%33 : memref<2x128xf32, #tpu.memory_space<vmem>>)
      %c2_i32_29 = arith.constant 2 : i32
      %c21_i32_30 = arith.constant 21 : i32
      %c0_i32_31 = arith.constant 0 : i32
      %36 = tpu.memref_slice %arg1[%c21_i32_30, %c0_i32_31] : memref<32x128xf32, #tpu.memory_space<any>> -> memref<1x128xf32, #tpu.memory_space<any>>
      %c5_i32_32 = arith.constant 5 : i32
      %c0_i32_33 = arith.constant 0 : i32
      %37 = tpu.memref_slice %arg2[%c5_i32_32, %c0_i32_33] : memref<8x128xf32, #tpu.memory_space<vmem>> -> memref<1x128xf32, #tpu.memory_space<vmem>>
      %38 = tpu.memref_slice %arg3[%c2_i32_29] : memref<4x!tpu.dma_semaphore, #tpu.memory_space<semaphore_mem>> -> memref<1x!tpu.dma_semaphore, #tpu.memory_space<semaphore_mem>>
      %39 = tpu.memref_squeeze %38 : memref<1x!tpu.dma_semaphore, #tpu.memory_space<semaphore_mem>> -> memref<!tpu.dma_semaphore, #tpu.memory_space<semaphore_mem>>
      tpu.wait_dma2 semaphore(%39 : memref<!tpu.dma_semaphore, #tpu.memory_space<semaphore_mem>>) src(%36 : memref<1x128xf32, #tpu.memory_space<any>>) dst(%37 : memref<1x128xf32, #tpu.memory_space<vmem>>)
      %c3_i32_34 = arith.constant 3 : i32
      %c28_i32_35 = arith.constant 28 : i32
      %c0_i32_36 = arith.constant 0 : i32
      %40 = tpu.memref_slice %arg1[%c28_i32_35, %c0_i32_36] : memref<32x128xf32, #tpu.memory_space<any>> -> memref<2x128xf32, #tpu.memory_space<any>>
      %c6_i32_37 = arith.constant 6 : i32
      %c0_i32_38 = arith.constant 0 : i32
      %41 = tpu.memref_slice %arg2[%c6_i32_37, %c0_i32_38] : memref<8x128xf32, #tpu.memory_space<vmem>> -> memref<2x128xf32, #tpu.memory_space<vmem>>
      %42 = tpu.memref_slice %arg3[%c3_i32_34] : memref<4x!tpu.dma_semaphore, #tpu.memory_space<semaphore_mem>> -> memref<1x!tpu.dma_semaphore, #tpu.memory_space<semaphore_mem>>
      %43 = tpu.memref_squeeze %42 : memref<1x!tpu.dma_semaphore, #tpu.memory_space<semaphore_mem>> -> memref<!tpu.dma_semaphore, #tpu.memory_space<semaphore_mem>>
      tpu.wait_dma2 semaphore(%43 : memref<!tpu.dma_semaphore, #tpu.memory_space<semaphore_mem>>) src(%40 : memref<2x128xf32, #tpu.memory_space<any>>) dst(%41 : memref<2x128xf32, #tpu.memory_space<vmem>>)
    } else {
    }
    %c3_i32 = arith.constant 3 : i32
    %9 = arith.cmpi eq, %arg0, %c3_i32 : i32
    %10 = arith.extui %9 : i1 to i32
    %c0_i32_3 = arith.constant 0 : i32
    %11 = arith.cmpi ne, %10, %c0_i32_3 : i32
    scf.if %11 {
      %c0_i32_4 = arith.constant 0 : i32
      %c6_i32 = arith.constant 6 : i32
      %c0_i32_5 = arith.constant 0 : i32
      %12 = tpu.memref_slice %arg1[%c6_i32, %c0_i32_5] : memref<32x128xf32, #tpu.memory_space<any>> -> memref<2x128xf32, #tpu.memory_space<any>>
      %c0_i32_6 = arith.constant 0 : i32
      %c0_i32_7 = arith.constant 0 : i32
      %13 = tpu.memref_slice %arg2[%c0_i32_6, %c0_i32_7] : memref<8x128xf32, #tpu.memory_space<vmem>> -> memref<2x128xf32, #tpu.memory_space<vmem>>
      %14 = tpu.memref_slice %arg3[%c0_i32_4] : memref<4x!tpu.dma_semaphore, #tpu.memory_space<semaphore_mem>> -> memref<1x!tpu.dma_semaphore, #tpu.memory_space<semaphore_mem>>
      %15 = tpu.memref_squeeze %14 : memref<1x!tpu.dma_semaphore, #tpu.memory_space<semaphore_mem>> -> memref<!tpu.dma_semaphore, #tpu.memory_space<semaphore_mem>>
      tpu.enqueue_dma source(%12 : memref<2x128xf32, #tpu.memory_space<any>>) target(%13 : memref<2x128xf32, #tpu.memory_space<vmem>>) target_semaphore(%15 : memref<!tpu.dma_semaphore, #tpu.memory_space<semaphore_mem>>)
      %c1_i32_8 = arith.constant 1 : i32
      %c14_i32 = arith.constant 14 : i32
      %c0_i32_9 = arith.constant 0 : i32
      %16 = tpu.memref_slice %arg1[%c14_i32, %c0_i32_9] : memref<32x128xf32, #tpu.memory_space<any>> -> memref<2x128xf32, #tpu.memory_space<any>>
      %c2_i32_10 = arith.constant 2 : i32
      %c0_i32_11 = arith.constant 0 : i32
      %17 = tpu.memref_slice %arg2[%c2_i32_10, %c0_i32_11] : memref<8x128xf32, #tpu.memory_space<vmem>> -> memref<2x128xf32, #tpu.memory_space<vmem>>
      %18 = tpu.memref_slice %arg3[%c1_i32_8] : memref<4x!tpu.dma_semaphore, #tpu.memory_space<semaphore_mem>> -> memref<1x!tpu.dma_semaphore, #tpu.memory_space<semaphore_mem>>
      %19 = tpu.memref_squeeze %18 : memref<1x!tpu.dma_semaphore, #tpu.memory_space<semaphore_mem>> -> memref<!tpu.dma_semaphore, #tpu.memory_space<semaphore_mem>>
      tpu.enqueue_dma source(%16 : memref<2x128xf32, #tpu.memory_space<any>>) target(%17 : memref<2x128xf32, #tpu.memory_space<vmem>>) target_semaphore(%19 : memref<!tpu.dma_semaphore, #tpu.memory_space<semaphore_mem>>)
      %c2_i32_12 = arith.constant 2 : i32
      %c22_i32 = arith.constant 22 : i32
      %c0_i32_13 = arith.constant 0 : i32
      %20 = tpu.memref_slice %arg1[%c22_i32, %c0_i32_13] : memref<32x128xf32, #tpu.memory_space<any>> -> memref<2x128xf32, #tpu.memory_space<any>>
      %c4_i32 = arith.constant 4 : i32
      %c0_i32_14 = arith.constant 0 : i32
      %21 = tpu.memref_slice %arg2[%c4_i32, %c0_i32_14] : memref<8x128xf32, #tpu.memory_space<vmem>> -> memref<2x128xf32, #tpu.memory_space<vmem>>
      %22 = tpu.memref_slice %arg3[%c2_i32_12] : memref<4x!tpu.dma_semaphore, #tpu.memory_space<semaphore_mem>> -> memref<1x!tpu.dma_semaphore, #tpu.memory_space<semaphore_mem>>
      %23 = tpu.memref_squeeze %22 : memref<1x!tpu.dma_semaphore, #tpu.memory_space<semaphore_mem>> -> memref<!tpu.dma_semaphore, #tpu.memory_space<semaphore_mem>>
      tpu.enqueue_dma source(%20 : memref<2x128xf32, #tpu.memory_space<any>>) target(%21 : memref<2x128xf32, #tpu.memory_space<vmem>>) target_semaphore(%23 : memref<!tpu.dma_semaphore, #tpu.memory_space<semaphore_mem>>)
      %c3_i32_15 = arith.constant 3 : i32
      %c30_i32 = arith.constant 30 : i32
      %c0_i32_16 = arith.constant 0 : i32
      %24 = tpu.memref_slice %arg1[%c30_i32, %c0_i32_16] : memref<32x128xf32, #tpu.memory_space<any>> -> memref<2x128xf32, #tpu.memory_space<any>>
      %c6_i32_17 = arith.constant 6 : i32
      %c0_i32_18 = arith.constant 0 : i32
      %25 = tpu.memref_slice %arg2[%c6_i32_17, %c0_i32_18] : memref<8x128xf32, #tpu.memory_space<vmem>> -> memref<2x128xf32, #tpu.memory_space<vmem>>
      %26 = tpu.memref_slice %arg3[%c3_i32_15] : memref<4x!tpu.dma_semaphore, #tpu.memory_space<semaphore_mem>> -> memref<1x!tpu.dma_semaphore, #tpu.memory_space<semaphore_mem>>
      %27 = tpu.memref_squeeze %26 : memref<1x!tpu.dma_semaphore, #tpu.memory_space<semaphore_mem>> -> memref<!tpu.dma_semaphore, #tpu.memory_space<semaphore_mem>>
      tpu.enqueue_dma source(%24 : memref<2x128xf32, #tpu.memory_space<any>>) target(%25 : memref<2x128xf32, #tpu.memory_space<vmem>>) target_semaphore(%27 : memref<!tpu.dma_semaphore, #tpu.memory_space<semaphore_mem>>)
      %c0_i32_19 = arith.constant 0 : i32
      %c6_i32_20 = arith.constant 6 : i32
      %c0_i32_21 = arith.constant 0 : i32
      %28 = tpu.memref_slice %arg1[%c6_i32_20, %c0_i32_21] : memref<32x128xf32, #tpu.memory_space<any>> -> memref<2x128xf32, #tpu.memory_space<any>>
      %c0_i32_22 = arith.constant 0 : i32
      %c0_i32_23 = arith.constant 0 : i32
      %29 = tpu.memref_slice %arg2[%c0_i32_22, %c0_i32_23] : memref<8x128xf32, #tpu.memory_space<vmem>> -> memref<2x128xf32, #tpu.memory_space<vmem>>
      %30 = tpu.memref_slice %arg3[%c0_i32_19] : memref<4x!tpu.dma_semaphore, #tpu.memory_space<semaphore_mem>> -> memref<1x!tpu.dma_semaphore, #tpu.memory_space<semaphore_mem>>
      %31 = tpu.memref_squeeze %30 : memref<1x!tpu.dma_semaphore, #tpu.memory_space<semaphore_mem>> -> memref<!tpu.dma_semaphore, #tpu.memory_space<semaphore_mem>>
      tpu.wait_dma2 semaphore(%31 : memref<!tpu.dma_semaphore, #tpu.memory_space<semaphore_mem>>) src(%28 : memref<2x128xf32, #tpu.memory_space<any>>) dst(%29 : memref<2x128xf32, #tpu.memory_space<vmem>>)
      %c1_i32_24 = arith.constant 1 : i32
      %c14_i32_25 = arith.constant 14 : i32
      %c0_i32_26 = arith.constant 0 : i32
      %32 = tpu.memref_slice %arg1[%c14_i32_25, %c0_i32_26] : memref<32x128xf32, #tpu.memory_space<any>> -> memref<2x128xf32, #tpu.memory_space<any>>
      %c2_i32_27 = arith.constant 2 : i32
      %c0_i32_28 = arith.constant 0 : i32
      %33 = tpu.memref_slice %arg2[%c2_i32_27, %c0_i32_28] : memref<8x128xf32, #tpu.memory_space<vmem>> -> memref<2x128xf32, #tpu.memory_space<vmem>>
      %34 = tpu.memref_slice %arg3[%c1_i32_24] : memref<4x!tpu.dma_semaphore, #tpu.memory_space<semaphore_mem>> -> memref<1x!tpu.dma_semaphore, #tpu.memory_space<semaphore_mem>>
      %35 = tpu.memref_squeeze %34 : memref<1x!tpu.dma_semaphore, #tpu.memory_space<semaphore_mem>> -> memref<!tpu.dma_semaphore, #tpu.memory_space<semaphore_mem>>
      tpu.wait_dma2 semaphore(%35 : memref<!tpu.dma_semaphore, #tpu.memory_space<semaphore_mem>>) src(%32 : memref<2x128xf32, #tpu.memory_space<any>>) dst(%33 : memref<2x128xf32, #tpu.memory_space<vmem>>)
      %c2_i32_29 = arith.constant 2 : i32
      %c22_i32_30 = arith.constant 22 : i32
      %c0_i32_31 = arith.constant 0 : i32
      %36 = tpu.memref_slice %arg1[%c22_i32_30, %c0_i32_31] : memref<32x128xf32, #tpu.memory_space<any>> -> memref<2x128xf32, #tpu.memory_space<any>>
      %c4_i32_32 = arith.constant 4 : i32
      %c0_i32_33 = arith.constant 0 : i32
      %37 = tpu.memref_slice %arg2[%c4_i32_32, %c0_i32_33] : memref<8x128xf32, #tpu.memory_space<vmem>> -> memref<2x128xf32, #tpu.memory_space<vmem>>
      %38 = tpu.memref_slice %arg3[%c2_i32_29] : memref<4x!tpu.dma_semaphore, #tpu.memory_space<semaphore_mem>> -> memref<1x!tpu.dma_semaphore, #tpu.memory_space<semaphore_mem>>
      %39 = tpu.memref_squeeze %38 : memref<1x!tpu.dma_semaphore, #tpu.memory_space<semaphore_mem>> -> memref<!tpu.dma_semaphore, #tpu.memory_space<semaphore_mem>>
      tpu.wait_dma2 semaphore(%39 : memref<!tpu.dma_semaphore, #tpu.memory_space<semaphore_mem>>) src(%36 : memref<2x128xf32, #tpu.memory_space<any>>) dst(%37 : memref<2x128xf32, #tpu.memory_space<vmem>>)
      %c3_i32_34 = arith.constant 3 : i32
      %c30_i32_35 = arith.constant 30 : i32
      %c0_i32_36 = arith.constant 0 : i32
      %40 = tpu.memref_slice %arg1[%c30_i32_35, %c0_i32_36] : memref<32x128xf32, #tpu.memory_space<any>> -> memref<2x128xf32, #tpu.memory_space<any>>
      %c6_i32_37 = arith.constant 6 : i32
      %c0_i32_38 = arith.constant 0 : i32
      %41 = tpu.memref_slice %arg2[%c6_i32_37, %c0_i32_38] : memref<8x128xf32, #tpu.memory_space<vmem>> -> memref<2x128xf32, #tpu.memory_space<vmem>>
      %42 = tpu.memref_slice %arg3[%c3_i32_34] : memref<4x!tpu.dma_semaphore, #tpu.memory_space<semaphore_mem>> -> memref<1x!tpu.dma_semaphore, #tpu.memory_space<semaphore_mem>>
      %43 = tpu.memref_squeeze %42 : memref<1x!tpu.dma_semaphore, #tpu.memory_space<semaphore_mem>> -> memref<!tpu.dma_semaphore, #tpu.memory_space<semaphore_mem>>
      tpu.wait_dma2 semaphore(%43 : memref<!tpu.dma_semaphore, #tpu.memory_space<semaphore_mem>>) src(%40 : memref<2x128xf32, #tpu.memory_space<any>>) dst(%41 : memref<2x128xf32, #tpu.memory_space<vmem>>)
    } else {
    }
    return
  }
  func.func @transform_1(%arg0: i32) -> (i32, i32) {
    %c0_i32 = arith.constant 0 : i32
    %c0_i32_0 = arith.constant 0 : i32
    return %arg0, %c0_i32 : i32, i32
  }
}

</mosaic_0001>

<llo_original>
// kernel: tpu_custom_call.1
$region0: #{tpu_custom_call.1}
  #allocation0 [shape = 'u32[]', space=smem, size = 0x4, offset = 0x4, fixed_abs, tag = 'smem constant byte address 0x4 - core index']
  #allocation1 [shape = 'u32[144,128]{1,0:T(1,128)}', space=vmem, size = 0x12000, scoped, tag = 'internal scratch']
  #allocation2 [shape = 's32[4]{0}', space=sflag, size = 0x10, scoped, tag = 'scratch operand']
  #allocation5 [shape = 's32[]', space=sflag, size = 0x4, offset = 0, fixed_abs, tag = 'sflag constant byte address 0x0 - dummy sync flag']
  #allocation6 [shape = 's32[]', space=sflag, size = 0x4, offset = 0, fixed_abs, tag = 'sflag constant byte address 0x0 - dummy sync flag']
  #allocation7 [shape = 'u32[]', space=smem, size = 0x4, offset = 0x44, fixed_abs, tag = 'smem constant byte address 0x44 - assertion arg 0']
  #allocation8 [shape = 'u32[]', space=smem, size = 0x4, offset = 0x48, fixed_abs, tag = 'smem constant byte address 0x48 - assertion arg 1']
  #allocation9 [shape = 's32[]', space=sflag, size = 0x4, offset = 0, fixed_abs, tag = 'sflag constant byte address 0x0 - dummy sync flag']
  #allocation10 [shape = 's32[]', space=sflag, size = 0x4, offset = 0, fixed_abs, tag = 'sflag constant byte address 0x0 - dummy sync flag']
  #allocation11 [shape = 's32[]', space=sflag, size = 0x4, offset = 0, fixed_abs, tag = 'sflag constant byte address 0x0 - dummy sync flag']
  #allocation12 [shape = 's32[]', space=sflag, size = 0x4, offset = 0, fixed_abs, tag = 'sflag constant byte address 0x0 - dummy sync flag']
  #allocation13 [shape = 's32[]', space=sflag, size = 0x4, offset = 0, fixed_abs, tag = 'sflag constant byte address 0x0 - dummy sync flag']
  #allocation14 [shape = 's32[]', space=sflag, size = 0x4, offset = 0, fixed_abs, tag = 'sflag constant byte address 0x0 - dummy sync flag']
  #allocation15 [shape = 's32[]', space=sflag, size = 0x4, offset = 0, fixed_abs, tag = 'sflag constant byte address 0x0 - dummy sync flag']
  #allocation16 [shape = 's32[]', space=sflag, size = 0x4, offset = 0, fixed_abs, tag = 'sflag constant byte address 0x0 - dummy sync flag']
  #allocation17 [shape = 's32[]', space=sflag, size = 0x4, offset = 0, fixed_abs, tag = 'sflag constant byte address 0x0 - dummy sync flag']
  #allocation18 [shape = 's32[]', space=sflag, size = 0x4, offset = 0, fixed_abs, tag = 'sflag constant byte address 0x0 - dummy sync flag']
  #allocation19 [shape = 's32[]', space=sflag, size = 0x4, offset = 0, fixed_abs, tag = 'sflag constant byte address 0x0 - dummy sync flag']
  #allocation20 [shape = 's32[]', space=sflag, size = 0x4, offset = 0, fixed_abs, tag = 'sflag constant byte address 0x0 - dummy sync flag']
  #allocation21 [shape = 's32[]', space=sflag, size = 0x4, offset = 0, fixed_abs, tag = 'sflag constant byte address 0x0 - dummy sync flag']
  #allocation22 [shape = 's32[]', space=sflag, size = 0x4, offset = 0, fixed_abs, tag = 'sflag constant byte address 0x0 - dummy sync flag']
  #allocation23 [shape = 's32[]', space=sflag, size = 0x4, offset = 0, fixed_abs, tag = 'sflag constant byte address 0x0 - dummy sync flag']
  #allocation24 [shape = 's32[]', space=sflag, size = 0x4, offset = 0, fixed_abs, tag = 'sflag constant byte address 0x0 - dummy sync flag']
  #allocation25 [shape = 's32[]', space=sflag, size = 0x4, offset = 0, fixed_abs, tag = 'sflag constant byte address 0x0 - dummy sync flag']
  #allocation26 [shape = 's32[]', space=sflag, size = 0x4, offset = 0, fixed_abs, tag = 'sflag constant byte address 0x0 - dummy sync flag']
  #allocation27 [shape = 's32[]', space=sflag, size = 0x4, offset = 0, fixed_abs, tag = 'sflag constant byte address 0x0 - dummy sync flag']
  #allocation28 [shape = 's32[]', space=sflag, size = 0x4, offset = 0, fixed_abs, tag = 'sflag constant byte address 0x0 - dummy sync flag']
  #allocation29 [shape = 's32[]', space=sflag, size = 0x4, offset = 0, fixed_abs, tag = 'sflag constant byte address 0x0 - dummy sync flag']
  #allocation30 [shape = 's32[]', space=sflag, size = 0x4, offset = 0, fixed_abs, tag = 'sflag constant byte address 0x0 - dummy sync flag']
  #allocation31 [shape = 's32[]', space=sflag, size = 0x4, offset = 0, fixed_abs, tag = 'sflag constant byte address 0x0 - dummy sync flag']
  #allocation32 [shape = 's32[]', space=sflag, size = 0x4, offset = 0, fixed_abs, tag = 'sflag constant byte address 0x0 - dummy sync flag']
  #allocation33 [shape = 's32[]', space=sflag, size = 0x4, offset = 0, fixed_abs, tag = 'sflag constant byte address 0x0 - dummy sync flag']
  #allocation34 [shape = 's32[]', space=sflag, size = 0x4, offset = 0, fixed_abs, tag = 'sflag constant byte address 0x0 - dummy sync flag']
  #allocation35 [shape = 's32[]', space=sflag, size = 0x4, offset = 0, fixed_abs, tag = 'sflag constant byte address 0x0 - dummy sync flag']
  #allocation36 [shape = 's32[]', space=sflag, size = 0x4, offset = 0, fixed_abs, tag = 'sflag constant byte address 0x0 - dummy sync flag']
  #allocation37 [shape = 's32[]', space=sflag, size = 0x4, offset = 0, fixed_abs, tag = 'sflag constant byte address 0x0 - dummy sync flag']
  #allocation38 [shape = 's32[]', space=sflag, size = 0x4, offset = 0, fixed_abs, tag = 'sflag constant byte address 0x0 - dummy sync flag']
  %s0 = inlined_call_operand.hbm [shape: f32[32,128], index: 0, kind: input, shape index: {}]
  %s1 = inlined_call_operand.hbm [shape: f32[32,128], index: 1, kind: output, shape index: {}]
  %s2 = sld [smem:[#allocation0]]
  $region105: #{tpu_custom_call.1} parent=0
    _
  %s4 = ssub.s32 1, %s2
  %s5 = scalar_select 0, %s4, %s2
  $region1: #{tpu_custom_call.1} parent=0
    #allocation3 [shape = 'u8[8192]{0}', space=vmem, size = 0x2000, scoped, tag = 'output window, operand 0']
    #allocation4 [shape = 's32[2]{0}', space=sflag, size = 0x8, scoped, tag = 'scoped memory for tpu_custom_call.1']
    %6 = vsyncpa [#allocation4], 0
    %s7 = scalar_lea.sflag [#allocation4], 1
    %8 = vsyncpa %s7, 0
    loop: start=0, step=1, limit=5
    $region2: #{tpu_custom_call.1} parent=1 // loop_pre_header
      _
    $region3: #{tpu_custom_call.1} parent=1 // loop_header
      %s10 = sphi 0, %s14
      %p11 = scmp.ge.s32.totalorder %s10, 5
      %s19 = sphi 0, %s21
      %s22 = sphi 0, %s19
      %s32 = sphi 0, %s22
    $region4: #{tpu_custom_call.1} parent=1 // loop_header_branch
      %13 = sbr.rel (%p11) target = $region8
    $region5: #{tpu_custom_call.1} parent=1 // loop_body
      %s15 = ssub.s32 %s10, 1
      %s16 = sadd.s32 %s10, 1
      %s17 = ssub.s32 %s10, %s16
      %p18 = scmp.eq.s32.totalorder %s17, 0
      %s20 = sadd.s32 %s19, 1
      %s21 = scalar_select %p18, %s19, %s20
      %p23 = pneg %p18
      %p24 = scmp.eq.s32.totalorder %s10, 3
      %p25 = por %p23, %p24
      %p26 = scmp.ne.s32.totalorder %s19, %s22
      %p27 = scmp.eq.s32.totalorder %s10, 0
      %p28 = por %p26, %p27
      %p29 = scmp.ne.s32.totalorder %s19, %s22
      %p30 = scmp.eq.s32.totalorder %s15, 3
      %p31 = por %p29, %p30
      %p33 = scmp.ne.s32.totalorder %s22, %s32
      %p34 = scmp.eq.s32.totalorder %s15, 0
      %p35 = por %p33, %p34
      %p36 = scmp.lt.s32.totalorder %s10, 4
      // Predicated region
      $region9: #{tpu_custom_call.1} parent=5 // pred_check
        %p37 = pneg %p36
      $region10: #{tpu_custom_call.1} parent=5 // pred_check_branch
        %39 = sbr.rel (%p37) target = $region12
      $region11: #{tpu_custom_call.1} parent=5 // pred_region
        %p40 = pneg %p28
        %p41 = pneg %p25
        %s42 = sand.u32 %s19, 1
        %s43 = scalar_lea.sflag [#allocation4], %s42
        %s44 = sand.u32 %s19, 1
        %s45 = smul.addr %s44, 8
        %s46 = scalar_lea.vmem [#allocation3], %s45
        %p47 = scmp.eq.s32.totalorder %s10, 0
        // Predicated region
        $region13: #{tpu_custom_call.1} parent=11 // pred_check
          %p48 = pneg %p47
        $region14: #{tpu_custom_call.1} parent=11 // pred_check_branch
          %50 = sbr.rel (%p48) target = $region16
        $region15: #{tpu_custom_call.1} parent=11 // pred_region
          // Predicated region
          $region17: #{tpu_custom_call.1} parent=15 // pred_check
            _
          $region18: #{tpu_custom_call.1} parent=15 // pred_check_branch
            %52 = sbr.rel target = $region20
          $region19: #{tpu_custom_call.1} parent=15 // pred_region
            %53 = sst [smem:[#allocation7]] [#allocation6]
            %54 = sst [smem:[#allocation8]] [#allocation5]
          $region20: #{tpu_custom_call.1} parent=15 // pred_fallthru
            _
          %56 = shalt.err (0)
          %s58 = sshll.u32 %s46, 4
          %s59 = int_to_ptr.vmem [resolvable:$true] %s58
          %61 = dma.hbm_to_vmem [thread:$0]  %s0, 16, %s59, [#allocation2]
          %s62 = scalar_lea.hbm %s0, 128
          %s63 = scalar_lea.vmem %s46, 1 [#allocation3]
          %s64 = scalar_lea.sflag [#allocation2], 1
          // Predicated region
          $region21: #{tpu_custom_call.1} parent=15 // pred_check
            _
          $region22: #{tpu_custom_call.1} parent=15 // pred_check_branch
            %66 = sbr.rel target = $region24
          $region23: #{tpu_custom_call.1} parent=15 // pred_region
            %67 = sst [smem:[#allocation7]] [#allocation10]
            %68 = sst [smem:[#allocation8]] [#allocation9]
          $region24: #{tpu_custom_call.1} parent=15 // pred_fallthru
            _
          %70 = shalt.err (0)
          %s72 = sshll.u32 %s63, 4
          %s73 = int_to_ptr.vmem [resolvable:$true] %s72
          %75 = dma.hbm_to_vmem [thread:$0]  %s62, 48, %s73, %s64
          %s76 = scalar_lea.hbm %s0, 256
          %s77 = scalar_lea.vmem %s46, 4 [#allocation3]
          %s78 = scalar_lea.sflag [#allocation2], 2
          // Predicated region
          $region25: #{tpu_custom_call.1} parent=15 // pred_check
            _
          $region26: #{tpu_custom_call.1} parent=15 // pred_check_branch
            %80 = sbr.rel target = $region28
          $region27: #{tpu_custom_call.1} parent=15 // pred_region
            %81 = sst [smem:[#allocation7]] [#allocation12]
            %82 = sst [smem:[#allocation8]] [#allocation11]
          $region28: #{tpu_custom_call.1} parent=15 // pred_fallthru
            _
          %84 = shalt.err (0)
          %s86 = sshll.u32 %s77, 4
          %s87 = int_to_ptr.vmem [resolvable:$true] %s86
          %89 = dma.hbm_to_vmem [thread:$0]  %s76, 32, %s87, %s78
          %s90 = scalar_lea.hbm %s0, 384
          %s91 = scalar_lea.vmem %s46, 6 [#allocation3]
          %s92 = scalar_lea.sflag [#allocation2], 3
          // Predicated region
          $region29: #{tpu_custom_call.1} parent=15 // pred_check
            _
          $region30: #{tpu_custom_call.1} parent=15 // pred_check_branch
            %94 = sbr.rel target = $region32
          $region31: #{tpu_custom_call.1} parent=15 // pred_region
            %95 = sst [smem:[#allocation7]] [#allocation14]
            %96 = sst [smem:[#allocation8]] [#allocation13]
          $region32: #{tpu_custom_call.1} parent=15 // pred_fallthru
            _
          %98 = shalt.err (0)
          %s100 = sshll.u32 %s91, 4
          %s101 = int_to_ptr.vmem [resolvable:$true] %s100
          %103 = dma.hbm_to_vmem [thread:$0]  %s90, 32, %s101, %s92
          %s104 = smul.u32 1, 1
          %s105 = sshll.u32 %s104, 4
          %106 = dma.done [#allocation2], %s105
          %s107 = smul.u32 3, 1
          %s108 = sshll.u32 %s107, 4
          %109 = dma.done %s64, %s108
          %s110 = smul.u32 2, 1
          %s111 = sshll.u32 %s110, 4
          %112 = dma.done %s78, %s111
          %s113 = sshll.u32 %s110, 4
          %114 = dma.done %s92, %s113
        $region16: #{tpu_custom_call.1} parent=11 // pred_fallthru
          _
        %p115 = scmp.eq.s32.totalorder %s10, 1
        // Predicated region
        $region33: #{tpu_custom_call.1} parent=11 // pred_check
          %p116 = pneg %p115
        $region34: #{tpu_custom_call.1} parent=11 // pred_check_branch
          %118 = sbr.rel (%p116) target = $region36
        $region35: #{tpu_custom_call.1} parent=11 // pred_region
          %s119 = scalar_lea.hbm %s0, 16
          // Predicated region
          $region37: #{tpu_custom_call.1} parent=35 // pred_check
            _
          $region38: #{tpu_custom_call.1} parent=35 // pred_check_branch
            %121 = sbr.rel target = $region40
          $region39: #{tpu_custom_call.1} parent=35 // pred_region
            %122 = sst [smem:[#allocation7]] [#allocation16]
            %123 = sst [smem:[#allocation8]] [#allocation15]
          $region40: #{tpu_custom_call.1} parent=35 // pred_fallthru
            _
          %125 = shalt.err (0)
          %s127 = sshll.u32 %s46, 4
          %s128 = int_to_ptr.vmem [resolvable:$true] %s127
          %130 = dma.hbm_to_vmem [thread:$0]  %s119, 32, %s128, [#allocation2]
          %s131 = scalar_lea.hbm %s0, 176
          %s132 = scalar_lea.vmem %s46, 2 [#allocation3]
          %s133 = scalar_lea.sflag [#allocation2], 1
          // Predicated region
          $region41: #{tpu_custom_call.1} parent=35 // pred_check
            _
          $region42: #{tpu_custom_call.1} parent=35 // pred_check_branch
            %135 = sbr.rel target = $region44
          $region43: #{tpu_custom_call.1} parent=35 // pred_region
            %136 = sst [smem:[#allocation7]] [#allocation18]
            %137 = sst [smem:[#allocation8]] [#allocation17]
          $region44: #{tpu_custom_call.1} parent=35 // pred_fallthru
            _
          %139 = shalt.err (0)
          %s141 = sshll.u32 %s132, 4
          %s142 = int_to_ptr.vmem [resolvable:$true] %s141
          %144 = dma.hbm_to_vmem [thread:$0]  %s131, 16, %s142, %s133
          %s145 = scalar_lea.hbm %s0, 288
          %s146 = scalar_lea.vmem %s46, 3 [#allocation3]
          %s147 = scalar_lea.sflag [#allocation2], 2
          // Predicated region
          $region45: #{tpu_custom_call.1} parent=35 // pred_check
            _
          $region46: #{tpu_custom_call.1} parent=35 // pred_check_branch
            %149 = sbr.rel target = $region48
          $region47: #{tpu_custom_call.1} parent=35 // pred_region
            %150 = sst [smem:[#allocation7]] [#allocation20]
            %151 = sst [smem:[#allocation8]] [#allocation19]
          $region48: #{tpu_custom_call.1} parent=35 // pred_fallthru
            _
          %153 = shalt.err (0)
          %s155 = sshll.u32 %s146, 4
          %s156 = int_to_ptr.vmem [resolvable:$true] %s155
          %158 = dma.hbm_to_vmem [thread:$0]  %s145, 48, %s156, %s147
          %s159 = scalar_lea.hbm %s0, 416
          %s160 = scalar_lea.vmem %s46, 6 [#allocation3]
          %s161 = scalar_lea.sflag [#allocation2], 3
          // Predicated region
          $region49: #{tpu_custom_call.1} parent=35 // pred_check
            _
          $region50: #{tpu_custom_call.1} parent=35 // pred_check_branch
            %163 = sbr.rel target = $region52
          $region51: #{tpu_custom_call.1} parent=35 // pred_region
            %164 = sst [smem:[#allocation7]] [#allocation22]
            %165 = sst [smem:[#allocation8]] [#allocation21]
          $region52: #{tpu_custom_call.1} parent=35 // pred_fallthru
            _
          %167 = shalt.err (0)
          %s169 = sshll.u32 %s160, 4
          %s170 = int_to_ptr.vmem [resolvable:$true] %s169
          %172 = dma.hbm_to_vmem [thread:$0]  %s159, 32, %s170, %s161
          %s173 = smul.u32 2, 1
          %s174 = sshll.u32 %s173, 4
          %175 = dma.done [#allocation2], %s174
          %s176 = smul.u32 1, 1
          %s177 = sshll.u32 %s176, 4
          %178 = dma.done %s133, %s177
          %s179 = smul.u32 3, 1
          %s180 = sshll.u32 %s179, 4
          %181 = dma.done %s147, %s180
          %s182 = sshll.u32 %s173, 4
          %183 = dma.done %s161, %s182
        $region36: #{tpu_custom_call.1} parent=11 // pred_fallthru
          _
        %p184 = scmp.eq.s32.totalorder %s10, 2
        // Predicated region
        $region53: #{tpu_custom_call.1} parent=11 // pred_check
          %p185 = pneg %p184
        $region54: #{tpu_custom_call.1} parent=11 // pred_check_branch
          %187 = sbr.rel (%p185) target = $region56
        $region55: #{tpu_custom_call.1} parent=11 // pred_region
          %s188 = scalar_lea.hbm %s0, 48
          // Predicated region
          $region57: #{tpu_custom_call.1} parent=55 // pred_check
            _
          $region58: #{tpu_custom_call.1} parent=55 // pred_check_branch
            %190 = sbr.rel target = $region60
          $region59: #{tpu_custom_call.1} parent=55 // pred_region
            %191 = sst [smem:[#allocation7]] [#allocation24]
            %192 = sst [smem:[#allocation8]] [#allocation23]
          $region60: #{tpu_custom_call.1} parent=55 // pred_fallthru
            _
          %194 = shalt.err (0)
          %s196 = sshll.u32 %s46, 4
          %s197 = int_to_ptr.vmem [resolvable:$true] %s196
          %199 = dma.hbm_to_vmem [thread:$0]  %s188, 48, %s197, [#allocation2]
          %s200 = scalar_lea.hbm %s0, 192
          %s201 = scalar_lea.vmem %s46, 3 [#allocation3]
          %s202 = scalar_lea.sflag [#allocation2], 1
          // Predicated region
          $region61: #{tpu_custom_call.1} parent=55 // pred_check
            _
          $region62: #{tpu_custom_call.1} parent=55 // pred_check_branch
            %204 = sbr.rel target = $region64
          $region63: #{tpu_custom_call.1} parent=55 // pred_region
            %205 = sst [smem:[#allocation7]] [#allocation26]
            %206 = sst [smem:[#allocation8]] [#allocation25]
          $region64: #{tpu_custom_call.1} parent=55 // pred_fallthru
            _
          %208 = shalt.err (0)
          %s210 = sshll.u32 %s201, 4
          %s211 = int_to_ptr.vmem [resolvable:$true] %s210
          %213 = dma.hbm_to_vmem [thread:$0]  %s200, 32, %s211, %s202
          %s214 = scalar_lea.hbm %s0, 336
          %s215 = scalar_lea.vmem %s46, 5 [#allocation3]
          %s216 = scalar_lea.sflag [#allocation2], 2
          // Predicated region
          $region65: #{tpu_custom_call.1} parent=55 // pred_check
            _
          $region66: #{tpu_custom_call.1} parent=55 // pred_check_branch
            %218 = sbr.rel target = $region68
          $region67: #{tpu_custom_call.1} parent=55 // pred_region
            %219 = sst [smem:[#allocation7]] [#allocation28]
            %220 = sst [smem:[#allocation8]] [#allocation27]
          $region68: #{tpu_custom_call.1} parent=55 // pred_fallthru
            _
          %222 = shalt.err (0)
          %s224 = sshll.u32 %s215, 4
          %s225 = int_to_ptr.vmem [resolvable:$true] %s224
          %227 = dma.hbm_to_vmem [thread:$0]  %s214, 16, %s225, %s216
          %s228 = scalar_lea.hbm %s0, 448
          %s229 = scalar_lea.vmem %s46, 6 [#allocation3]
          %s230 = scalar_lea.sflag [#allocation2], 3
          // Predicated region
          $region69: #{tpu_custom_call.1} parent=55 // pred_check
            _
          $region70: #{tpu_custom_call.1} parent=55 // pred_check_branch
            %232 = sbr.rel target = $region72
          $region71: #{tpu_custom_call.1} parent=55 // pred_region
            %233 = sst [smem:[#allocation7]] [#allocation30]
            %234 = sst [smem:[#allocation8]] [#allocation29]
          $region72: #{tpu_custom_call.1} parent=55 // pred_fallthru
            _
          %236 = shalt.err (0)
          %s238 = sshll.u32 %s229, 4
          %s239 = int_to_ptr.vmem [resolvable:$true] %s238
          %241 = dma.hbm_to_vmem [thread:$0]  %s228, 32, %s239, %s230
          %s242 = smul.u32 3, 1
          %s243 = sshll.u32 %s242, 4
          %244 = dma.done [#allocation2], %s243
          %s245 = smul.u32 2, 1
          %s246 = sshll.u32 %s245, 4
          %247 = dma.done %s202, %s246
          %s248 = smul.u32 1, 1
          %s249 = sshll.u32 %s248, 4
          %250 = dma.done %s216, %s249
          %s251 = sshll.u32 %s245, 4
          %252 = dma.done %s230, %s251
        $region56: #{tpu_custom_call.1} parent=11 // pred_fallthru
          _
        %p253 = scmp.eq.s32.totalorder %s10, 3
        // Predicated region
        $region73: #{tpu_custom_call.1} parent=11 // pred_check
          %p254 = pneg %p253
        $region74: #{tpu_custom_call.1} parent=11 // pred_check_branch
          %256 = sbr.rel (%p254) target = $region76
        $region75: #{tpu_custom_call.1} parent=11 // pred_region
          %s257 = scalar_lea.hbm %s0, 96
          // Predicated region
          $region77: #{tpu_custom_call.1} parent=75 // pred_check
            _
          $region78: #{tpu_custom_call.1} parent=75 // pred_check_branch
            %259 = sbr.rel target = $region80
          $region79: #{tpu_custom_call.1} parent=75 // pred_region
            %260 = sst [smem:[#allocation7]] [#allocation32]
            %261 = sst [smem:[#allocation8]] [#allocation31]
          $region80: #{tpu_custom_call.1} parent=75 // pred_fallthru
            _
          %263 = shalt.err (0)
          %s265 = sshll.u32 %s46, 4
          %s266 = int_to_ptr.vmem [resolvable:$true] %s265
          %268 = dma.hbm_to_vmem [thread:$0]  %s257, 32, %s266, [#allocation2]
          %s269 = scalar_lea.hbm %s0, 224
          %s270 = scalar_lea.vmem %s46, 2 [#allocation3]
          %s271 = scalar_lea.sflag [#allocation2], 1
          // Predicated region
          $region81: #{tpu_custom_call.1} parent=75 // pred_check
            _
          $region82: #{tpu_custom_call.1} parent=75 // pred_check_branch
            %273 = sbr.rel target = $region84
          $region83: #{tpu_custom_call.1} parent=75 // pred_region
            %274 = sst [smem:[#allocation7]] [#allocation34]
            %275 = sst [smem:[#allocation8]] [#allocation33]
          $region84: #{tpu_custom_call.1} parent=75 // pred_fallthru
            _
          %277 = shalt.err (0)
          %s279 = sshll.u32 %s270, 4
          %s280 = int_to_ptr.vmem [resolvable:$true] %s279
          %282 = dma.hbm_to_vmem [thread:$0]  %s269, 32, %s280, %s271
          %s283 = scalar_lea.hbm %s0, 352
          %s284 = scalar_lea.vmem %s46, 4 [#allocation3]
          %s285 = scalar_lea.sflag [#allocation2], 2
          // Predicated region
          $region85: #{tpu_custom_call.1} parent=75 // pred_check
            _
          $region86: #{tpu_custom_call.1} parent=75 // pred_check_branch
            %287 = sbr.rel target = $region88
          $region87: #{tpu_custom_call.1} parent=75 // pred_region
            %288 = sst [smem:[#allocation7]] [#allocation36]
            %289 = sst [smem:[#allocation8]] [#allocation35]
          $region88: #{tpu_custom_call.1} parent=75 // pred_fallthru
            _
          %291 = shalt.err (0)
          %s293 = sshll.u32 %s284, 4
          %s294 = int_to_ptr.vmem [resolvable:$true] %s293
          %296 = dma.hbm_to_vmem [thread:$0]  %s283, 32, %s294, %s285
          %s297 = scalar_lea.hbm %s0, 480
          %s298 = scalar_lea.vmem %s46, 6 [#allocation3]
          %s299 = scalar_lea.sflag [#allocation2], 3
          // Predicated region
          $region89: #{tpu_custom_call.1} parent=75 // pred_check
            _
          $region90: #{tpu_custom_call.1} parent=75 // pred_check_branch
            %301 = sbr.rel target = $region92
          $region91: #{tpu_custom_call.1} parent=75 // pred_region
            %302 = sst [smem:[#allocation7]] [#allocation38]
            %303 = sst [smem:[#allocation8]] [#allocation37]
          $region92: #{tpu_custom_call.1} parent=75 // pred_fallthru
            _
          %305 = shalt.err (0)
          %s307 = sshll.u32 %s298, 4
          %s308 = int_to_ptr.vmem [resolvable:$true] %s307
          %310 = dma.hbm_to_vmem [thread:$0]  %s297, 32, %s308, %s299
          %s311 = smul.u32 2, 1
          %s312 = sshll.u32 %s311, 4
          %313 = dma.done [#allocation2], %s312
          %s314 = sshll.u32 %s311, 4
          %315 = dma.done %s271, %s314
          %s316 = sshll.u32 %s311, 4
          %317 = dma.done %s285, %s316
          %s318 = sshll.u32 %s311, 4
          %319 = dma.done %s299, %s318
        $region76: #{tpu_custom_call.1} parent=11 // pred_fallthru
          _
        %s320 = sand.u32 %s19, 1
        %s321 = scalar_lea.sflag [#allocation4], %s320
        %s322 = sand.u32 %s19, 1
        %s323 = smul.addr %s322, 8
        %s324 = scalar_lea.vmem [#allocation3], %s323
        // Predicated region
        $region93: #{tpu_custom_call.1} parent=11 // pred_check
          %p325 = pneg %p25
        $region94: #{tpu_custom_call.1} parent=11 // pred_check_branch
          %327 = sbr.rel (%p325) target = $region96
        $region95: #{tpu_custom_call.1} parent=11 // pred_region
          %s329 = ssub.s32 128, 128
          %330 = vsyncadd %s321, %s329
          %s331 = smul.addr %s10, 128
          %s332 = scalar_lea.hbm %s1, %s331
          %s334 = sshll.u32 %s324, 4
          %s335 = int_to_ptr.vmem [resolvable:$true] %s334
          %337 = dma.vmem_to_hbm [thread:$0]  %s335, 128, %s332, %s321
        $region96: #{tpu_custom_call.1} parent=11 // pred_fallthru
          _
      $region12: #{tpu_custom_call.1} parent=5 // pred_fallthru
        _
      %p338 = scmp.le.s32.totalorder 1, %s10
      // Predicated region
      $region97: #{tpu_custom_call.1} parent=5 // pred_check
        %p339 = pneg %p338
      $region98: #{tpu_custom_call.1} parent=5 // pred_check_branch
        %341 = sbr.rel (%p339) target = $region100
      $region99: #{tpu_custom_call.1} parent=5 // pred_region
        %s342 = ssub.s32 %s10, 1
        // Predicated region
        $region101: #{tpu_custom_call.1} parent=99 // pred_check
          %p343 = pneg %p31
        $region102: #{tpu_custom_call.1} parent=99 // pred_check_branch
          %345 = sbr.rel (%p343) target = $region104
        $region103: #{tpu_custom_call.1} parent=99 // pred_region
          %s346 = sand.u32 %s22, 1
          %s347 = scalar_lea.sflag [#allocation4], %s346
          %s348 = sand.u32 %s22, 1
          %s349 = smul.addr %s348, 8
          %s350 = scalar_lea.vmem [#allocation3], %s349
          %351 = dma.done %s347, 128
        $region104: #{tpu_custom_call.1} parent=99 // pred_fallthru
          _
      $region100: #{tpu_custom_call.1} parent=5 // pred_fallthru
        _
    $region6: #{tpu_custom_call.1} parent=1 // loop_footer
      %s14 = sadd.s32 1, %s10
    $region7: #{tpu_custom_call.1} parent=1 // loop_footer_branch
      %9 = sbr.rel target = $region3
    $region8: #{tpu_custom_call.1} parent=1 // loop_exit
      _
    %352 = vsyncpa [#allocation4], 1
    %s353 = scalar_lea.sflag [#allocation4], 1
    %354 = vsyncpa %s353, 1
  %355 = vsyncmov [#allocation2]
  %s356 = vpop.sfrf %355
  %p357 = scmp.eq.s32.totalorder %s356, 0
  %p358 = pneg %p357
  %360 = shalt.err (%p358)
  %s361 = scalar_lea.sflag [#allocation2], 1
  %362 = vsyncmov %s361
  %s363 = vpop.sfrf %362
  %p364 = scmp.eq.s32.totalorder %s363, 0
  %p365 = pneg %p364
  %367 = shalt.err (%p365)
  %s368 = scalar_lea.sflag [#allocation2], 2
  %369 = vsyncmov %s368
  %s370 = vpop.sfrf %369
  %p371 = scmp.eq.s32.totalorder %s370, 0
  %p372 = pneg %p371
  %374 = shalt.err (%p372)
  %s375 = scalar_lea.sflag [#allocation2], 3
  %376 = vsyncmov %s375
  %s377 = vpop.sfrf %376
  %p378 = scmp.eq.s32.totalorder %s377, 0
  %p379 = pneg %p378
  %381 = shalt.err (%p379)

</llo_original>
